<compile_context>
chip_gen: v6e
topology: v6e:2x2x1
jax: 0.10.0
libtpu: 0.0.40
codegen_flags: <defaults>
</compile_context>

<pallas_src>
import math

import jax
import jax.numpy as jnp
import numpy as np
from jax import lax
from jax.experimental import pallas as pl
from jax.experimental.pallas import tpu as pltpu


def _hsigmoid(x):
    # The module's Hsigmoid: relu6(x + 3) / 3   (range [0, 2])
    return jnp.clip(x + 3.0, 0.0, 6.0) * (1.0 / 3.0)


def _fold_bn(gamma, beta, mean, var, eps):
    a = gamma / jnp.sqrt(var + eps)
    return a, beta - mean * a


def _round_up(v, m):
    return (v + m - 1) // m * m


# --------------------------- Pallas kernel ----------------------------------

def _dbb_kernel(x_ref, conv_ref, m_ref, bias_ref, scale_ref, out_ref, res_ref):
    """One (batch_block, hw_tile) step of the fused conv path.

    x_ref     [bb, cin,  hwt] bf16   input of the (folded) DynamicBranch path
    conv_ref  [bb, cout, hwt] bf16   dbb_reparam KxK conv output
    m_ref     [bb, cout, cin] bf16   per-sample composed DynamicBranch matrix
    bias_ref  [bb, cout, 1]   f32    per-sample folded bias
    scale_ref [bb, cout, 1]   f32    per-sample channel scale (already hsig)
    out_ref   [bb, cout, hwt] bf16   scale * conv + res
    res_ref   [bb, cout, hwt] bf16   DynamicBranch residual output
    """
    # One batched bf16 MXU dot per sample (batched einsum lowers to MXU dots),
    # f32 accumulation; all VPU work (bias, scale, combine) stays f32.
    res = jnp.einsum('boc,bcl->bol', m_ref[...], x_ref[...],
                     preferred_element_type=jnp.float32)
    res = res + bias_ref[...]
    res_ref[...] = res.astype(res_ref.dtype)
    out = scale_ref[...] * conv_ref[...].astype(jnp.float32) + res
    out_ref[...] = out.astype(out_ref.dtype)


# --------------------------- host-side folding -------------------------------

def _dynamic_branch_fold(x, params, eps):
    """Batched scalar chain + BN/weight folding (plain XLA, f32).

    Returns (M [b,cout,cin], c_bias [b,cout], scale [b,cout]) such that
      res(x) = M @ x + c_bias      (per sample, over flattened spatial)
      out    = scale * reparam_conv(x) + res
    exactly matches the module's DynamicBranch in real arithmetic.
    """
    b = x.shape[0]
    dim = params['wq'].shape[0]
    P = lax.Precision.HIGHEST

    # scalar chain (GAP -> fc -> SEModule_small -> fc_phi / fc_scale)
    y = x.mean(axis=(2, 3))                                          # [b, cin]
    y1 = jnp.dot(y, params['w1'].T, precision=P)                     # [b, sq]
    y2 = y1 * _hsigmoid(jnp.dot(y1, params['w2'].T, precision=P))
    phi = jnp.dot(y2, params['wphi'].T, precision=P).reshape(b, dim, dim)
    scale = _hsigmoid(jnp.dot(y2, params['wsc'].T, precision=P))     # [b, cout]

    # fold eval-mode BatchNorms into affines
    bn1a, bn1b = _fold_bn(params['bn1_gamma'], params['bn1_beta'],
                          params['bn1_mean'], params['bn1_var'], eps)
    bn2a, bn2b = _fold_bn(params['bn2_gamma'], params['bn2_beta'],
                          params['bn2_mean'], params['bn2_var'], eps)

    # A = I + diag(bn2a) @ phi                  [b, dim, dim]
    A = jnp.eye(dim, dtype=jnp.float32)[None] + bn2a[None, :, None] * phi
    # M = wp @ A @ diag(bn1a) @ wq              [b, cout, cin]
    wq1 = bn1a[:, None] * params['wq']                               # [dim, cin]
    WA = jnp.einsum('oi,bij->boj', params['wp'], A, precision=P)     # [b, cout, dim]
    M = jnp.einsum('boj,jc->boc', WA, wq1, precision=P)              # [b, cout, cin]
    # c = wp @ A @ bn1b + wp @ bn2b             [b, cout]
    c = (jnp.einsum('boj,j->bo', WA, bn1b, precision=P)
         + jnp.dot(params['wp'], bn2b, precision=P)[None])
    return M, c, scale


def _reparam_conv(x, params, kernel_size, stride, padding, groups):
    # KxK reparam conv on XLA's conv path, bf16 MXU with f32 accumulation.
    # TODO(synk): fusing this conv into the Pallas kernel (shifted 1x1 dots
    # with a halo) would remove its HBM round trip; not done here.
    conv = lax.conv_general_dilated(
        x.astype(jnp.bfloat16), params['w_rep'].astype(jnp.bfloat16),
        window_strides=(stride, stride), padding=[(padding, padding)] * 2,
        dimension_numbers=('NCHW', 'OIHW', 'NCHW'),
        feature_group_count=groups, preferred_element_type=jnp.float32)
    return conv + params['b_rep'][None, :, None, None]


# ------------------------------ wrapper --------------------------------------

def dynamic_dbb_forward(x, params, *, kernel_size=3, stride=1, padding=None,
                        groups=1, eps=1e-5,
                        vmem_budget_bytes=24 * 1024 * 1024):
    """Forward of DynamicDiverseBranchBlock (nonlinear = Identity).

    Returns (out, res) = (scale * dbb_reparam(x) + res, res), both bf16.
    """
    b, cin, H, W = x.shape
    if padding is None:
        padding = kernel_size // 2
    cout = params['wp'].shape[0]

    # ---- batched scalar prologue + full BN/weight fold (plain XLA) ----------
    M, c_bias, scale = _dynamic_branch_fold(x, params, eps)

    # ---- dbb_reparam KxK conv ------------------------------------------------
    conv = _reparam_conv(x, params, kernel_size, stride, padding, groups)
    h, w = conv.shape[2], conv.shape[3]
    hw = h * w

    # ---- conv-path kernel inputs (bf16 HBM storage, lane-padded) -------------
    xs = x if stride == 1 else x[:, :, ::stride, ::stride]
    assert xs.shape[2] == h and xs.shape[3] == w, \
        "strided 1x1 q-conv spatial dims must match the reparam conv output"
    hw_pad = _round_up(hw, 128)
    pad = hw_pad - hw

    x_flat = xs.reshape(b, cin, hw).astype(jnp.bfloat16)
    conv_flat = conv.reshape(b, cout, hw).astype(jnp.bfloat16)
    if pad:
        x_flat = jnp.pad(x_flat, ((0, 0), (0, 0), (0, pad)))
        conv_flat = jnp.pad(conv_flat, ((0, 0), (0, 0), (0, pad)))

    m_b = M.astype(jnp.bfloat16)
    bias3 = c_bias.reshape(b, cout, 1).astype(jnp.float32)
    scale3 = scale.reshape(b, cout, 1).astype(jnp.float32)

    # ---- tiling: channel-aware VMEM byte budget, lane-dense tiles ------------
    # Per (sample, column): double-buffered bf16 x + conv + out + res blocks,
    # plus ~f32 intermediates (res / out before the bf16 store).
    col_bytes = 2 * (2 * cin + 3 * 2 * cout) + 8 * cout
    max_cols = max(128, vmem_budget_bytes // col_bytes)          # bb * hwt
    hwt = min(hw_pad, max_cols, 2048)
    hwt = max(128, (hwt // 128) * 128)
    bb = int(min(b, 8, max(1, max_cols // hwt)))
    while b % bb:
        bb -= 1
    # ensure >= 2 grid steps when possible (v7x has two TensorCores)
    if (b // bb) * pl.cdiv(hw_pad, hwt) < 2:
        if bb > 1:
            bb = max(1, bb // 2)
            while b % bb:
                bb -= 1
        elif hw_pad >= 256:
            hwt = max(128, ((hw_pad // 2) // 128) * 128)
    grid = (b // bb, pl.cdiv(hw_pad, hwt))

    def tile_map(ib, it):
        return (ib, 0, it)

    def batch_map(ib, it):
        return (ib, 0, 0)

    out, res = pl.pallas_call(
        _dbb_kernel,
        out_shape=(jax.ShapeDtypeStruct((b, cout, hw_pad), jnp.bfloat16),
                   jax.ShapeDtypeStruct((b, cout, hw_pad), jnp.bfloat16)),
        grid=grid,
        in_specs=[
            pl.BlockSpec((bb, cin, hwt), tile_map),      # x (bf16)
            pl.BlockSpec((bb, cout, hwt), tile_map),     # reparam conv (bf16)
            pl.BlockSpec((bb, cout, cin), batch_map),    # composed M (bf16)
            pl.BlockSpec((bb, cout, 1), batch_map),      # folded bias (f32)
            pl.BlockSpec((bb, cout, 1), batch_map),      # scale (f32)
        ],
        out_specs=(
            pl.BlockSpec((bb, cout, hwt), tile_map),
            pl.BlockSpec((bb, cout, hwt), tile_map),
        ),
        compiler_params=pltpu.CompilerParams(
            dimension_semantics=("parallel", "parallel"),
            vmem_limit_bytes=48 * 1024 * 1024),
    )(x_flat, conv_flat, m_b, bias3, scale3)

    out = out[:, :, :hw].reshape(b, cout, h, w)
    res = res[:, :, :hw].reshape(b, cout, h, w)
    return out, res


# -------------------------- matched XLA reference ----------------------------

def matched_reference(x, params, *, kernel_size=3, stride=1, padding=None,
                      groups=1, eps=1e-5):
    """Plain-XLA mirror of the Pallas path's numerics (same folding + casts)."""
    b, cin, H, W = x.shape
    if padding is None:
        padding = kernel_size // 2
    cout = params['wp'].shape[0]

    M, c_bias, scale = _dynamic_branch_fold(x, params, eps)
    conv = _reparam_conv(x, params, kernel_size, stride, padding, groups)
    h, w = conv.shape[2], conv.shape[3]
    hw = h * w

    xs = x if stride == 1 else x[:, :, ::stride, ::stride]
    x_flat = xs.reshape(b, cin, hw).astype(jnp.bfloat16)
    conv_flat = conv.reshape(b, cout, hw).astype(jnp.bfloat16)

    res = jnp.einsum('boc,bcl->bol', M.astype(jnp.bfloat16), x_flat,
                     preferred_element_type=jnp.float32) + c_bias[:, :, None]
    out = scale[:, :, None] * conv_flat.astype(jnp.float32) + res
    return (out.astype(jnp.bfloat16).reshape(b, cout, h, w),
            res.astype(jnp.bfloat16).reshape(b, cout, h, w))


# --------------------------- pure-f32 reference -------------------------------

def reference_forward(x, params, *, kernel_size=3, stride=1, padding=None,
                      groups=1, eps=1e-5):
    """Pure-JAX f32 mirror of DynamicDiverseBranchBlock.forward (eval-mode BN)."""
    P = lax.Precision.HIGHEST
    b, cin, H, W = x.shape
    if padding is None:
        padding = kernel_size // 2
    dim = params['wq'].shape[0]

    # DynamicBranch scalar chain
    y = x.mean(axis=(2, 3))
    y1 = jnp.dot(y, params['w1'].T, precision=P)
    y2 = y1 * _hsigmoid(jnp.dot(y1, params['w2'].T, precision=P))
    phi = jnp.dot(y2, params['wphi'].T, precision=P).reshape(b, dim, dim)
    scale = _hsigmoid(jnp.dot(y2, params['wsc'].T, precision=P))[:, :, None, None]

    # DynamicBranch conv path
    xs = x if stride == 1 else x[:, :, ::stride, ::stride]
    h, w = xs.shape[2], xs.shape[3]
    r = jnp.einsum('oc,bchw->bohw', params['wq'], xs, precision=P)
    r = ((r - params['bn1_mean'][None, :, None, None])
         / jnp.sqrt(params['bn1_var'] + eps)[None, :, None, None]
         * params['bn1_gamma'][None, :, None, None]
         + params['bn1_beta'][None, :, None, None])
    r = r.reshape(b, dim, h * w)
    t = jnp.einsum('bij,bjl->bil', phi, r, precision=P)
    t = ((t - params['bn2_mean'][None, :, None])
         / jnp.sqrt(params['bn2_var'] + eps)[None, :, None]
         * params['bn2_gamma'][None, :, None]
         + params['bn2_beta'][None, :, None]) + r
    res = jnp.einsum('od,bdl->bol', params['wp'], t, precision=P)
    res = res.reshape(b, -1, h, w)

    # dbb_reparam conv + combine (nonlinear = Identity)
    conv = lax.conv_general_dilated(
        x, params['w_rep'], window_strides=(stride, stride),
        padding=[(padding, padding)] * 2,
        dimension_numbers=('NCHW', 'OIHW', 'NCHW'),
        feature_group_count=groups, precision=P)
    conv = conv + params['b_rep'][None, :, None, None]
    out = scale * conv + res
    return out, res


if __name__ == "__main__":
    b, cin, cout, H, W = 2, 64, 32, 16, 16
    ksize, stride, padding, groups = 3, 1, 1, 1
    dim = int(math.sqrt(cin))                    # 8
    squeeze = max(cin, dim * dim) // 16          # 4

    key = jax.random.PRNGKey(0)
    ks = jax.random.split(key, 20)

    def init(k, shape, s):
        return jax.random.normal(k, shape, jnp.float32) * s

    params = {
        'wq':        init(ks[0], (dim, cin), 0.15),
        'wp':        init(ks[1], (cout, dim), 0.2),
        'w1':        init(ks[2], (squeeze, cin), 0.5),
        'w2':        init(ks[3], (squeeze, squeeze), 1.0),
        'wphi':      init(ks[4], (dim * dim, squeeze), 1.0),
        'wsc':       init(ks[5], (cout, squeeze), 4.0),
        'bn1_gamma': jax.random.uniform(ks[6], (dim,), jnp.float32, 0.5, 1.5),
        'bn1_beta':  init(ks[7], (dim,), 0.1),
        'bn1_mean':  init(ks[8], (dim,), 0.1),
        'bn1_var':   jax.random.uniform(ks[9], (dim,), jnp.float32, 0.5, 1.5),
        'bn2_gamma': jax.random.uniform(ks[10], (dim,), jnp.float32, 0.5, 1.5),
        'bn2_beta':  init(ks[11], (dim,), 0.1),
        'bn2_mean':  init(ks[12], (dim,), 0.1),
        'bn2_var':   jax.random.uniform(ks[13], (dim,), jnp.float32, 0.5, 1.5),
        'w_rep':     init(ks[14], (cout, cin // groups, ksize, ksize), 0.05),
        'b_rep':     init(ks[15], (cout,), 0.1),
    }

    x = jax.random.normal(ks[16], (b, cin, H, W), jnp.float32)

    out, res = dynamic_dbb_forward(x, params, kernel_size=ksize, stride=stride,
                                   padding=padding, groups=groups)
    jax.block_until_ready((out, res))

    # tight check: matched XLA reference (same folding + bf16 casts)
    out_m, res_m = matched_reference(x, params, kernel_size=ksize, stride=stride,
                                     padding=padding, groups=groups)
    np.testing.assert_allclose(np.asarray(out, dtype=np.float32),
                               np.asarray(out_m, dtype=np.float32),
                               rtol=2e-2, atol=2e-2)
    np.testing.assert_allclose(np.asarray(res, dtype=np.float32),
                               np.asarray(res_m, dtype=np.float32),
                               rtol=2e-2, atol=2e-2)

    # sanity check vs the plain f32 module semantics (bounds bf16 storage error)
    out_f, res_f = reference_forward(x, params, kernel_size=ksize, stride=stride,
                                     padding=padding, groups=groups)
    np.testing.assert_allclose(np.asarray(out, dtype=np.float32),
                               np.asarray(out_f),
                               rtol=5e-2, atol=2e-1)
    np.testing.assert_allclose(np.asarray(res, dtype=np.float32),
                               np.asarray(res_f),
                               rtol=5e-2, atol=2e-1)

    print("KERNEL_OK")
</pallas_src>

<mosaic_0001>
module attributes {stable_mosaic.version = 11 : i64} {
  func.func @_dbb_kernel(%arg0: i32, %arg1: i32, %arg2: memref<1x64x256xbf16, #tpu.memory_space<vmem>>, %arg3: memref<1x32x256xbf16, #tpu.memory_space<vmem>>, %arg4: memref<1x32x64xbf16, #tpu.memory_space<vmem>>, %arg5: memref<1x32x1xf32, #tpu.memory_space<vmem>>, %arg6: memref<1x32x1xf32, #tpu.memory_space<vmem>>, %arg7: memref<1x32x256xbf16, #tpu.memory_space<vmem>>, %arg8: memref<1x32x256xbf16, #tpu.memory_space<vmem>>) attributes {dimension_semantics = [#tpu.dimension_semantics<parallel>, #tpu.dimension_semantics<parallel>], iteration_bounds = array<i64: 2, 1>, scalar_prefetch = 0 : i64, scratch_operands = 0 : i64, tpu.core_type = #tpu.core_type<tc>, window_params = [{transform_indices = @transform_0, window_bounds = array<i64: 1, 64, 256>}, {transform_indices = @transform_1, window_bounds = array<i64: 1, 32, 256>}, {transform_indices = @transform_2, window_bounds = array<i64: 1, 32, 64>}, {transform_indices = @transform_3, window_bounds = array<i64: 1, 32, 1>}, {transform_indices = @transform_4, window_bounds = array<i64: 1, 32, 1>}, {transform_indices = @transform_5, window_bounds = array<i64: 1, 32, 256>}, {transform_indices = @transform_6, window_bounds = array<i64: 1, 32, 256>}]} {
    %c0 = arith.constant 0 : index
    %c0_0 = arith.constant 0 : index
    %c0_1 = arith.constant 0 : index
    %0 = vector.load %arg4[%c0, %c0_0, %c0_1] : memref<1x32x64xbf16, #tpu.memory_space<vmem>>, vector<1x32x64xbf16>
    %c0_2 = arith.constant 0 : index
    %c0_3 = arith.constant 0 : index
    %c0_4 = arith.constant 0 : index
    %1 = vector.load %arg2[%c0_2, %c0_3, %c0_4] : memref<1x64x256xbf16, #tpu.memory_space<vmem>>, vector<1x64x256xbf16>
    "tpu.trace_start"() <{level = 10 : i32, message = "boc,bcl->bol"}> : () -> ()
    %cst = arith.constant dense<0.000000e+00> : vector<1x32x256xf32>
    %2 = tpu.matmul %0, %1, %cst {dimension_numbers = #tpu.dot_dimension_numbers<[2], [1], [1], [2], [0, 0, 0, 1, 1, 2], [0], [0]>} : vector<1x32x64xbf16>, vector<1x64x256xbf16>, vector<1x32x256xf32> -> vector<1x32x256xf32>
    "tpu.trace_stop"() : () -> ()
    %c0_5 = arith.constant 0 : index
    %c0_6 = arith.constant 0 : index
    %c0_7 = arith.constant 0 : index
    %3 = vector.load %arg5[%c0_5, %c0_6, %c0_7] : memref<1x32x1xf32, #tpu.memory_space<vmem>>, vector<1x32x1xf32>
    %4 = vector.broadcast %3 : vector<1x32x1xf32> to vector<1x32x256xf32>
    %5 = arith.addf %2, %4 : vector<1x32x256xf32>
    %6 = arith.truncf %5 : vector<1x32x256xf32> to vector<1x32x256xbf16>
    %c0_8 = arith.constant 0 : index
    %c0_9 = arith.constant 0 : index
    %c0_10 = arith.constant 0 : index
    %7 = vector.load %arg8[%c0_8, %c0_9, %c0_10] : memref<1x32x256xbf16, #tpu.memory_space<vmem>>, vector<1x32x256xbf16>
    tpu.vector_store %arg8[%c0_8, %c0_9, %c0_10], %6 {strides = array<i32>} : memref<1x32x256xbf16, #tpu.memory_space<vmem>>, vector<1x32x256xbf16>,
    %c0_11 = arith.constant 0 : index
    %c0_12 = arith.constant 0 : index
    %c0_13 = arith.constant 0 : index
    %8 = vector.load %arg6[%c0_11, %c0_12, %c0_13] : memref<1x32x1xf32, #tpu.memory_space<vmem>>, vector<1x32x1xf32>
    %c0_14 = arith.constant 0 : index
    %c0_15 = arith.constant 0 : index
    %c0_16 = arith.constant 0 : index
    %9 = vector.load %arg3[%c0_14, %c0_15, %c0_16] : memref<1x32x256xbf16, #tpu.memory_space<vmem>>, vector<1x32x256xbf16>
    %10 = arith.extf %9 : vector<1x32x256xbf16> to vector<1x32x256xf32>
    %11 = vector.broadcast %8 : vector<1x32x1xf32> to vector<1x32x256xf32>
    %12 = arith.mulf %11, %10 : vector<1x32x256xf32>
    %13 = arith.addf %12, %5 : vector<1x32x256xf32>
    %14 = arith.truncf %13 : vector<1x32x256xf32> to vector<1x32x256xbf16>
    %c0_17 = arith.constant 0 : index
    %c0_18 = arith.constant 0 : index
    %c0_19 = arith.constant 0 : index
    %15 = vector.load %arg7[%c0_17, %c0_18, %c0_19] : memref<1x32x256xbf16, #tpu.memory_space<vmem>>, vector<1x32x256xbf16>
    tpu.vector_store %arg7[%c0_17, %c0_18, %c0_19], %14 {strides = array<i32>} : memref<1x32x256xbf16, #tpu.memory_space<vmem>>, vector<1x32x256xbf16>,
    return
  }
  func.func @transform_0(%arg0: i32, %arg1: i32) -> (i32, i32, i32) {
    %c0_i32 = arith.constant 0 : i32
    %c0_i32_0 = arith.constant 0 : i32
    return %arg0, %c0_i32, %arg1 : i32, i32, i32
  }
  func.func @transform_1(%arg0: i32, %arg1: i32) -> (i32, i32, i32) {
    %c0_i32 = arith.constant 0 : i32
    %c0_i32_0 = arith.constant 0 : i32
    return %arg0, %c0_i32, %arg1 : i32, i32, i32
  }
  func.func @transform_2(%arg0: i32, %arg1: i32) -> (i32, i32, i32) {
    %c0_i32 = arith.constant 0 : i32
    %c0_i32_0 = arith.constant 0 : i32
    %c0_i32_1 = arith.constant 0 : i32
    return %arg0, %c0_i32, %c0_i32_0 : i32, i32, i32
  }
  func.func @transform_3(%arg0: i32, %arg1: i32) -> (i32, i32, i32) {
    %c0_i32 = arith.constant 0 : i32
    %c0_i32_0 = arith.constant 0 : i32
    %c0_i32_1 = arith.constant 0 : i32
    return %arg0, %c0_i32, %c0_i32_0 : i32, i32, i32
  }
  func.func @transform_4(%arg0: i32, %arg1: i32) -> (i32, i32, i32) {
    %c0_i32 = arith.constant 0 : i32
    %c0_i32_0 = arith.constant 0 : i32
    %c0_i32_1 = arith.constant 0 : i32
    return %arg0, %c0_i32, %c0_i32_0 : i32, i32, i32
  }
  func.func @transform_5(%arg0: i32, %arg1: i32) -> (i32, i32, i32) {
    %c0_i32 = arith.constant 0 : i32
    %c0_i32_0 = arith.constant 0 : i32
    return %arg0, %c0_i32, %arg1 : i32, i32, i32
  }
  func.func @transform_6(%arg0: i32, %arg1: i32) -> (i32, i32, i32) {
    %c0_i32 = arith.constant 0 : i32
    %c0_i32_0 = arith.constant 0 : i32
    return %arg0, %c0_i32, %arg1 : i32, i32, i32
  }
}

</mosaic_0001>

<llo_original>
// kernel: tpu_custom_call.1
$region0: #{tpu_custom_call.1}
  #allocation0 [shape = 'u32[]', space=smem, size = 0x4, offset = 0x4, fixed_abs, tag = 'smem constant byte address 0x4 - core index']
  #allocation1 [shape = 'u32[144,128]{1,0:T(1,128)}', space=vmem, size = 0x12000, scoped, tag = 'internal scratch']
  %s0 = inlined_call_operand.vmem [shape: bf16[2,64,256], index: 0, kind: input, shape index: {}]
  %s1 = inlined_call_operand.hbm [shape: bf16[2,32,256], index: 1, kind: input, shape index: {}]
  %s2 = inlined_call_operand.hbm [shape: bf16[2,32,64], index: 2, kind: input, shape index: {}]
  %s3 = inlined_call_operand.vmem [shape: f32[2,32,1], index: 3, kind: input, shape index: {}]
  %s4 = inlined_call_operand.vmem [shape: f32[2,32,1], index: 4, kind: input, shape index: {}]
  %s5 = inlined_call_operand.hbm [shape: bf16[2,32,256], index: 5, kind: output, shape index: {0}]
  %s6 = inlined_call_operand.hbm [shape: bf16[2,32,256], index: 6, kind: output, shape index: {1}]
  %7 = xla_tuple %s5, %s6
  %s8 = sld [smem:[#allocation0]]
  $region69: #{tpu_custom_call.1} parent=0
    _
  %s10 = ssub.s32 1, %s8
  %s11 = scalar_select 0, %s10, %s8
  $region1: #{tpu_custom_call.1} parent=0
    #allocation2 [shape = 'u8[32768]{0}', space=vmem, size = 0x8000, scoped, tag = 'input window, operand 1']
    #allocation3 [shape = 's32[2]{0}', space=sflag, size = 0x8, scoped, tag = 'scoped memory for tpu_custom_call.1']
    #allocation4 [shape = 's32[2]{0}', space=sflag, size = 0x8, scoped, tag = 'scoped memory for tpu_custom_call.1']
    #allocation5 [shape = 'u8[16384]{0}', space=vmem, size = 0x4000, scoped, tag = 'input window, operand 2']
    #allocation6 [shape = 's32[2]{0}', space=sflag, size = 0x8, scoped, tag = 'scoped memory for tpu_custom_call.1']
    #allocation7 [shape = 'u8[32768]{0}', space=vmem, size = 0x8000, scoped, tag = 'output window, operand 0']
    #allocation8 [shape = 'u8[32768]{0}', space=vmem, size = 0x8000, scoped, tag = 'output window, operand 1']
    #allocation9 [shape = 's32[2]{0}', space=sflag, size = 0x8, scoped, tag = 'scoped memory for tpu_custom_call.1']
    %12 = vsyncpa [#allocation3], 0
    %s13 = scalar_lea.sflag [#allocation3], 1
    %14 = vsyncpa %s13, 0
    %15 = vsyncpa [#allocation6], 0
    %s16 = scalar_lea.sflag [#allocation6], 1
    %17 = vsyncpa %s16, 0
    %18 = vsyncpa [#allocation4], 0
    %s19 = scalar_lea.sflag [#allocation4], 1
    %20 = vsyncpa %s19, 0
    %21 = vsyncpa [#allocation9], 0
    %s22 = scalar_lea.sflag [#allocation9], 1
    %23 = vsyncpa %s22, 0
    loop: start=0, step=1, limit=4
    $region2: #{tpu_custom_call.1} parent=1 // loop_pre_header
      _
    $region3: #{tpu_custom_call.1} parent=1 // loop_header
      %s25 = sphi 0, %s29
      %p26 = scmp.ge.s32.totalorder %s25, 4
      %s32 = sphi 0, %s44
      %s33 = sphi 0, %s40
      %s34 = sphi 0, %s32
      %s35 = sphi 0, %s33
      %s36 = sphi 0, %s34
      %s37 = sphi 0, %s35
      %s49 = sphi 0, %s51
      %s52 = sphi 0, %s49
      %s53 = sphi 0, %s52
      %s69 = sphi 0, %s53
      %s77 = sphi 0, %s79
      %s80 = sphi 0, %s77
      %s81 = sphi 0, %s80
      %s97 = sphi 0, %s81
      %s103 = sphi 0, %s105
      %s106 = sphi 0, %s103
      %s107 = sphi 0, %s106
      %s123 = sphi 0, %s107
      %s129 = sphi 0, %s131
      %s132 = sphi 0, %s129
      %s133 = sphi 0, %s132
      %s149 = sphi 0, %s133
      %s155 = sphi 0, %s157
      %s158 = sphi 0, %s155
      %s159 = sphi 0, %s158
      %s175 = sphi 0, %s159
      %s183 = sphi 0, %s185
      %s186 = sphi 0, %s183
      %s187 = sphi 0, %s186
      %s203 = sphi 0, %s187
      %s211 = sphi 0, %s213
      %s214 = sphi 0, %s211
      %s215 = sphi 0, %s214
      %s231 = sphi 0, %s215
    $region4: #{tpu_custom_call.1} parent=1 // loop_header_branch
      %28 = sbr.rel (%p26) target = $region8
    $region5: #{tpu_custom_call.1} parent=1 // loop_body
      %s30 = ssub.s32 %s25, 1
      %s31 = ssub.s32 %s25, 2
      %s38 = sadd.s32 1, %s33
      %p39 = scmp.ge.s32.totalorder %s38, 1
      %s40 = scalar_select %p39, 0, %s38
      %s41 = sadd.s32 1, %s32
      %s42 = scalar_select %p39, %s41, %s32
      %p43 = scmp.ge.s32.totalorder %s42, 2
      %s44 = scalar_select %p43, 0, %s42
      %s45 = ssub.s32 %s32, %s44
      %s46 = ssub.s32 %s33, %s40
      %s47 = sor.u32 %s45, %s46
      %p48 = scmp.eq.s32.totalorder %s47, 0
      %s50 = sadd.s32 %s49, 1
      %s51 = scalar_select %p48, %s49, %s50
      %p54 = pneg %p48
      %p55 = scmp.eq.s32.totalorder %s25, 1
      %p56 = por %p54, %p55
      %p57 = scmp.ne.s32.totalorder %s49, %s52
      %p58 = scmp.eq.s32.totalorder %s25, 0
      %p59 = por %p57, %p58
      %p60 = scmp.ne.s32.totalorder %s49, %s52
      %p61 = scmp.eq.s32.totalorder %s30, 1
      %p62 = por %p60, %p61
      %p63 = scmp.ne.s32.totalorder %s52, %s53
      %p64 = scmp.eq.s32.totalorder %s30, 0
      %p65 = por %p63, %p64
      %p66 = scmp.ne.s32.totalorder %s52, %s53
      %p67 = scmp.eq.s32.totalorder %s31, 1
      %p68 = por %p66, %p67
      %p70 = scmp.ne.s32.totalorder %s53, %s69
      %p71 = scmp.eq.s32.totalorder %s31, 0
      %p72 = por %p70, %p71
      %s73 = ssub.s32 %s32, %s44
      %s74 = ssub.s32 %s33, %s40
      %s75 = sor.u32 %s73, %s74
      %p76 = scmp.eq.s32.totalorder %s75, 0
      %s78 = sadd.s32 %s77, 1
      %s79 = scalar_select %p76, %s77, %s78
      %p82 = pneg %p76
      %p83 = scmp.eq.s32.totalorder %s25, 1
      %p84 = por %p82, %p83
      %p85 = scmp.ne.s32.totalorder %s77, %s80
      %p86 = scmp.eq.s32.totalorder %s25, 0
      %p87 = por %p85, %p86
      %p88 = scmp.ne.s32.totalorder %s77, %s80
      %p89 = scmp.eq.s32.totalorder %s30, 1
      %p90 = por %p88, %p89
      %p91 = scmp.ne.s32.totalorder %s80, %s81
      %p92 = scmp.eq.s32.totalorder %s30, 0
      %p93 = por %p91, %p92
      %p94 = scmp.ne.s32.totalorder %s80, %s81
      %p95 = scmp.eq.s32.totalorder %s31, 1
      %p96 = por %p94, %p95
      %p98 = scmp.ne.s32.totalorder %s81, %s97
      %p99 = scmp.eq.s32.totalorder %s31, 0
      %p100 = por %p98, %p99
      %s101 = ssub.s32 %s32, %s44
      %p102 = scmp.eq.s32.totalorder %s101, 0
      %s104 = sadd.s32 %s103, 1
      %s105 = scalar_select %p102, %s103, %s104
      %p108 = pneg %p102
      %p109 = scmp.eq.s32.totalorder %s25, 1
      %p110 = por %p108, %p109
      %p111 = scmp.ne.s32.totalorder %s103, %s106
      %p112 = scmp.eq.s32.totalorder %s25, 0
      %p113 = por %p111, %p112
      %p114 = scmp.ne.s32.totalorder %s103, %s106
      %p115 = scmp.eq.s32.totalorder %s30, 1
      %p116 = por %p114, %p115
      %p117 = scmp.ne.s32.totalorder %s106, %s107
      %p118 = scmp.eq.s32.totalorder %s30, 0
      %p119 = por %p117, %p118
      %p120 = scmp.ne.s32.totalorder %s106, %s107
      %p121 = scmp.eq.s32.totalorder %s31, 1
      %p122 = por %p120, %p121
      %p124 = scmp.ne.s32.totalorder %s107, %s123
      %p125 = scmp.eq.s32.totalorder %s31, 0
      %p126 = por %p124, %p125
      %s127 = ssub.s32 %s32, %s44
      %p128 = scmp.eq.s32.totalorder %s127, 0
      %s130 = sadd.s32 %s129, 1
      %s131 = scalar_select %p128, %s129, %s130
      %p134 = pneg %p128
      %p135 = scmp.eq.s32.totalorder %s25, 1
      %p136 = por %p134, %p135
      %p137 = scmp.ne.s32.totalorder %s129, %s132
      %p138 = scmp.eq.s32.totalorder %s25, 0
      %p139 = por %p137, %p138
      %p140 = scmp.ne.s32.totalorder %s129, %s132
      %p141 = scmp.eq.s32.totalorder %s30, 1
      %p142 = por %p140, %p141
      %p143 = scmp.ne.s32.totalorder %s132, %s133
      %p144 = scmp.eq.s32.totalorder %s30, 0
      %p145 = por %p143, %p144
      %p146 = scmp.ne.s32.totalorder %s132, %s133
      %p147 = scmp.eq.s32.totalorder %s31, 1
      %p148 = por %p146, %p147
      %p150 = scmp.ne.s32.totalorder %s133, %s149
      %p151 = scmp.eq.s32.totalorder %s31, 0
      %p152 = por %p150, %p151
      %s153 = ssub.s32 %s32, %s44
      %p154 = scmp.eq.s32.totalorder %s153, 0
      %s156 = sadd.s32 %s155, 1
      %s157 = scalar_select %p154, %s155, %s156
      %p160 = pneg %p154
      %p161 = scmp.eq.s32.totalorder %s25, 1
      %p162 = por %p160, %p161
      %p163 = scmp.ne.s32.totalorder %s155, %s158
      %p164 = scmp.eq.s32.totalorder %s25, 0
      %p165 = por %p163, %p164
      %p166 = scmp.ne.s32.totalorder %s155, %s158
      %p167 = scmp.eq.s32.totalorder %s30, 1
      %p168 = por %p166, %p167
      %p169 = scmp.ne.s32.totalorder %s158, %s159
      %p170 = scmp.eq.s32.totalorder %s30, 0
      %p171 = por %p169, %p170
      %p172 = scmp.ne.s32.totalorder %s158, %s159
      %p173 = scmp.eq.s32.totalorder %s31, 1
      %p174 = por %p172, %p173
      %p176 = scmp.ne.s32.totalorder %s159, %s175
      %p177 = scmp.eq.s32.totalorder %s31, 0
      %p178 = por %p176, %p177
      %s179 = ssub.s32 %s32, %s44
      %s180 = ssub.s32 %s33, %s40
      %s181 = sor.u32 %s179, %s180
      %p182 = scmp.eq.s32.totalorder %s181, 0
      %s184 = sadd.s32 %s183, 1
      %s185 = scalar_select %p182, %s183, %s184
      %p188 = pneg %p182
      %p189 = scmp.eq.s32.totalorder %s25, 1
      %p190 = por %p188, %p189
      %p191 = scmp.ne.s32.totalorder %s183, %s186
      %p192 = scmp.eq.s32.totalorder %s25, 0
      %p193 = por %p191, %p192
      %p194 = scmp.ne.s32.totalorder %s183, %s186
      %p195 = scmp.eq.s32.totalorder %s30, 1
      %p196 = por %p194, %p195
      %p197 = scmp.ne.s32.totalorder %s186, %s187
      %p198 = scmp.eq.s32.totalorder %s30, 0
      %p199 = por %p197, %p198
      %p200 = scmp.ne.s32.totalorder %s186, %s187
      %p201 = scmp.eq.s32.totalorder %s31, 1
      %p202 = por %p200, %p201
      %p204 = scmp.ne.s32.totalorder %s187, %s203
      %p205 = scmp.eq.s32.totalorder %s31, 0
      %p206 = por %p204, %p205
      %s207 = ssub.s32 %s32, %s44
      %s208 = ssub.s32 %s33, %s40
      %s209 = sor.u32 %s207, %s208
      %p210 = scmp.eq.s32.totalorder %s209, 0
      %s212 = sadd.s32 %s211, 1
      %s213 = scalar_select %p210, %s211, %s212
      %p216 = pneg %p210
      %p217 = scmp.eq.s32.totalorder %s25, 1
      %p218 = por %p216, %p217
      %p219 = scmp.ne.s32.totalorder %s211, %s214
      %p220 = scmp.eq.s32.totalorder %s25, 0
      %p221 = por %p219, %p220
      %p222 = scmp.ne.s32.totalorder %s211, %s214
      %p223 = scmp.eq.s32.totalorder %s30, 1
      %p224 = por %p222, %p223
      %p225 = scmp.ne.s32.totalorder %s214, %s215
      %p226 = scmp.eq.s32.totalorder %s30, 0
      %p227 = por %p225, %p226
      %p228 = scmp.ne.s32.totalorder %s214, %s215
      %p229 = scmp.eq.s32.totalorder %s31, 1
      %p230 = por %p228, %p229
      %p232 = scmp.ne.s32.totalorder %s215, %s231
      %p233 = scmp.eq.s32.totalorder %s31, 0
      %p234 = por %p232, %p233
      %p235 = scmp.le.s32.totalorder 1, %s25
      %p236 = scmp.lt.s32.totalorder %s25, 3
      %p237 = pnand %p235, %p236
      %p238 = pneg %p237
      // Predicated region
      $region9: #{tpu_custom_call.1} parent=5 // pred_check
        _
      $region10: #{tpu_custom_call.1} parent=5 // pred_check_branch
        %240 = sbr.rel (%p237) target = $region12
      $region11: #{tpu_custom_call.1} parent=5 // pred_region
        %s241 = ssub.s32 %s25, 1
      $region12: #{tpu_custom_call.1} parent=5 // pred_fallthru
        _
      %p242 = scmp.lt.s32.totalorder %s25, 2
      // Predicated region
      $region13: #{tpu_custom_call.1} parent=5 // pred_check
        %p243 = pneg %p242
      $region14: #{tpu_custom_call.1} parent=5 // pred_check_branch
        %245 = sbr.rel (%p243) target = $region16
      $region15: #{tpu_custom_call.1} parent=5 // pred_region
        // Predicated region
        $region17: #{tpu_custom_call.1} parent=15 // pred_check
          %p246 = pneg %p59
        $region18: #{tpu_custom_call.1} parent=15 // pred_check_branch
          %248 = sbr.rel (%p246) target = $region20
        $region19: #{tpu_custom_call.1} parent=15 // pred_region
          %s249 = smul.u32 2, %s33
          %p250 = scmp.lt.s32.totalorder %s32, 1
          %s251 = scalar_select %p250, %s32, 1
          %p252 = scmp.lt.s32.totalorder %s249, 1
          %s253 = scalar_select %p252, %s249, 1
          %s254 = smul.addr %s251, 16
          %s255 = sadd.s32 %s253, %s254
          %s256 = smul.addr %s255, 4
          %s257 = scalar_lea.vmem %s0, %s256
          %s258 = smul.u32 2, %s33
        $region20: #{tpu_custom_call.1} parent=15 // pred_fallthru
          _
        // Predicated region
        $region21: #{tpu_custom_call.1} parent=15 // pred_check
          %p259 = pneg %p87
        $region22: #{tpu_custom_call.1} parent=15 // pred_check_branch
          %261 = sbr.rel (%p259) target = $region24
        $region23: #{tpu_custom_call.1} parent=15 // pred_region
          %s262 = sand.u32 %s77, 1
          %s263 = scalar_lea.sflag [#allocation3], %s262
          %s264 = sand.u32 %s77, 1
          %s265 = smul.addr %s264, 32
          %s266 = scalar_lea.vmem [#allocation2], %s265
          %s267 = smul.u32 2, %s33
          %s269 = ssub.s32 512, 512
          %270 = vsyncadd %s263, %s269
          %s271 = smul.addr %s32, 8
          %s272 = sadd.s32 %s267, %s271
          %s273 = smul.addr %s272, 64
          %s274 = scalar_lea.hbm %s1, %s273
          %s275 = sshll.u32 %s266, 4
          %s276 = int_to_ptr.vmem [resolvable:$true] %s275
          %281 = dma.hbm_to_vmem [thread:$0]  %s274, 512, %s276, %s263, 128, 128, 8
        $region24: #{tpu_custom_call.1} parent=15 // pred_fallthru
          _
        // Predicated region
        $region25: #{tpu_custom_call.1} parent=15 // pred_check
          %p282 = pneg %p113
        $region26: #{tpu_custom_call.1} parent=15 // pred_check_branch
          %284 = sbr.rel (%p282) target = $region28
        $region27: #{tpu_custom_call.1} parent=15 // pred_region
          %s285 = sand.u32 %s103, 1
          %s286 = scalar_lea.sflag [#allocation6], %s285
          %s287 = sand.u32 %s103, 1
          %s288 = smul.addr %s287, 16
          %s289 = scalar_lea.vmem [#allocation5], %s288
          %s291 = ssub.s32 256, 256
          %292 = vsyncadd %s286, %s291
          %s293 = smul.addr %s32, 4
          %s294 = smul.addr %s293, 64
          %s295 = scalar_lea.hbm %s2, %s294
          %s296 = sshll.u32 %s289, 4
          %s297 = int_to_ptr.vmem [resolvable:$true] %s296
          %302 = dma.hbm_to_vmem [thread:$0]  %s295, 256, %s297, %s286, 64, 64, 4
        $region28: #{tpu_custom_call.1} parent=15 // pred_fallthru
          _
        // Predicated region
        $region29: #{tpu_custom_call.1} parent=15 // pred_check
          %p303 = pneg %p139
        $region30: #{tpu_custom_call.1} parent=15 // pred_check_branch
          %305 = sbr.rel (%p303) target = $region32
        $region31: #{tpu_custom_call.1} parent=15 // pred_region
          %p306 = scmp.lt.s32.totalorder %s32, 1
          %s307 = scalar_select %p306, %s32, 1
          %s308 = smul.addr %s307, 4
          %s309 = smul.addr %s308, 8
          %s310 = scalar_lea.vmem %s3, %s309
        $region32: #{tpu_custom_call.1} parent=15 // pred_fallthru
          _
        // Predicated region
        $region33: #{tpu_custom_call.1} parent=15 // pred_check
          %p311 = pneg %p165
        $region34: #{tpu_custom_call.1} parent=15 // pred_check_branch
          %313 = sbr.rel (%p311) target = $region36
        $region35: #{tpu_custom_call.1} parent=15 // pred_region
          %p314 = scmp.lt.s32.totalorder %s32, 1
          %s315 = scalar_select %p314, %s32, 1
          %s316 = smul.addr %s315, 4
          %s317 = smul.addr %s316, 8
          %s318 = scalar_lea.vmem %s4, %s317
        $region36: #{tpu_custom_call.1} parent=15 // pred_fallthru
          _
      $region16: #{tpu_custom_call.1} parent=5 // pred_fallthru
        _
      %p319 = scmp.le.s32.totalorder 1, %s25
      %p320 = scmp.lt.s32.totalorder %s25, 3
      %p321 = pnand %p319, %p320
      %p322 = pneg %p321
      // Predicated region
      $region37: #{tpu_custom_call.1} parent=5 // pred_check
        _
      $region38: #{tpu_custom_call.1} parent=5 // pred_check_branch
        %324 = sbr.rel (%p321) target = $region40
      $region39: #{tpu_custom_call.1} parent=5 // pred_region
        %s325 = ssub.s32 %s25, 1
        %s326 = sand.u32 %s80, 1
        %s327 = scalar_lea.sflag [#allocation3], %s326
        %s328 = sand.u32 %s80, 1
        %s329 = smul.addr %s328, 32
        %s330 = scalar_lea.vmem [#allocation2], %s329
        // Predicated region
        $region41: #{tpu_custom_call.1} parent=39 // pred_check
          %p331 = pneg %p93
        $region42: #{tpu_custom_call.1} parent=39 // pred_check_branch
          %333 = sbr.rel (%p331) target = $region44
        $region43: #{tpu_custom_call.1} parent=39 // pred_region
          %334 = dma.done %s327, 512
        $region44: #{tpu_custom_call.1} parent=39 // pred_fallthru
          _
        %s335 = sand.u32 %s106, 1
        %s336 = scalar_lea.sflag [#allocation6], %s335
        %s337 = sand.u32 %s106, 1
        %s338 = smul.addr %s337, 16
        %s339 = scalar_lea.vmem [#allocation5], %s338
        // Predicated region
        $region45: #{tpu_custom_call.1} parent=39 // pred_check
          %p340 = pneg %p119
        $region46: #{tpu_custom_call.1} parent=39 // pred_check_branch
          %342 = sbr.rel (%p340) target = $region48
        $region47: #{tpu_custom_call.1} parent=39 // pred_region
          %343 = dma.done %s336, 256
        $region48: #{tpu_custom_call.1} parent=39 // pred_fallthru
          _
        %s344 = smul.u32 2, %s35
        %p345 = scmp.lt.s32.totalorder %s34, 1
        %s346 = scalar_select %p345, %s34, 1
        %p347 = scmp.lt.s32.totalorder %s344, 1
        %s348 = scalar_select %p347, %s344, 1
        %s349 = smul.addr %s346, 16
        %s350 = sadd.s32 %s348, %s349
        %s351 = smul.addr %s350, 4
        %s352 = scalar_lea.vmem %s0, %s351
        %p353 = pneg %p65
        %p354 = pneg %p62
        %s355 = sand.u32 %s80, 1
        %s356 = scalar_lea.sflag [#allocation3], %s355
        %s357 = sand.u32 %s80, 1
        %s358 = smul.addr %s357, 32
        %s359 = scalar_lea.vmem [#allocation2], %s358
        %p360 = pneg %p93
        %p361 = pneg %p90
        %s362 = sand.u32 %s106, 1
        %s363 = scalar_lea.sflag [#allocation6], %s362
        %s364 = sand.u32 %s106, 1
        %s365 = smul.addr %s364, 16
        %s366 = scalar_lea.vmem [#allocation5], %s365
        %p367 = pneg %p119
        %p368 = pneg %p116
        %p369 = scmp.lt.s32.totalorder %s34, 1
        %s370 = scalar_select %p369, %s34, 1
        %s371 = smul.addr %s370, 4
        %s372 = smul.addr %s371, 8
        %s373 = scalar_lea.vmem %s3, %s372
        %p374 = pneg %p145
        %p375 = pneg %p142
        %p376 = scmp.lt.s32.totalorder %s34, 1
        %s377 = scalar_select %p376, %s34, 1
        %s378 = smul.addr %s377, 4
        %s379 = smul.addr %s378, 8
        %s380 = scalar_lea.vmem %s4, %s379
        %p381 = pneg %p171
        %p382 = pneg %p168
        %p383 = pneg %p199
        %p384 = pneg %p196
        %s385 = sand.u32 %s186, 1
        %s386 = scalar_lea.sflag [#allocation4], %s385
        %s387 = sand.u32 %s186, 1
        %s388 = smul.addr %s387, 32
        %s389 = scalar_lea.vmem [#allocation7], %s388
        %p390 = pneg %p227
        %p391 = pneg %p224
        %s392 = sand.u32 %s214, 1
        %s393 = scalar_lea.sflag [#allocation9], %s392
        %s394 = sand.u32 %s214, 1
        %s395 = smul.addr %s394, 32
        %s396 = scalar_lea.vmem [#allocation8], %s395
        %s397 = smul.u32 2, %s35
        %p398 = scmp.lt.s32.totalorder %s34, 1
        %s399 = scalar_select %p398, %s34, 1
        %p400 = scmp.lt.s32.totalorder %s397, 1
        %s401 = scalar_select %p400, %s397, 1
        %s402 = smul.addr %s399, 16
        %s403 = sadd.s32 %s401, %s402
        %s404 = smul.addr %s403, 4
        %s405 = scalar_lea.vmem %s0, %s404
        %s406 = smul.u32 2, %s35
        %s407 = smul.u32 2, %s35
        %p408 = scmp.lt.s32.totalorder %s34, 1
        %s409 = scalar_select %p408, %s34, 1
        %s410 = smul.addr %s409, 4
        %s411 = smul.addr %s410, 8
        %s412 = scalar_lea.vmem %s3, %s411
        %p413 = scmp.lt.s32.totalorder %s34, 1
        %s414 = scalar_select %p413, %s34, 1
        %s415 = smul.addr %s414, 4
        %s416 = smul.addr %s415, 8
        %s417 = scalar_lea.vmem %s4, %s416
        %s418 = smul.u32 2, %s35
        %s419 = smul.u32 2, %s35
        %v421 = vld [vmem:[%s339] sm:$0xf]
        %v422 = vld [vmem:[%s339 + $0x4] sm:$0xf]
        %v423 = vld [vmem:[%s339 + $0x8] sm:$0xf]
        %v424 = vld [vmem:[%s339 + $0xc] sm:$0xf]
        %v425 = vld [vmem:[%s405] sm:$0xff]
        %v426 = vld [vmem:[%s405 + $0x8] sm:$0xff]
        %v427 = vld [vmem:[%s405 + $0x10] sm:$0xff]
        %v428 = vld [vmem:[%s405 + $0x18] sm:$0xff]
        %v429 = vld [vmem:[%s405 + $0x20] sm:$0xff]
        %v430 = vld [vmem:[%s405 + $0x28] sm:$0xff]
        %v431 = vld [vmem:[%s405 + $0x30] sm:$0xff]
        %v432 = vld [vmem:[%s405 + $0x38] sm:$0xff]
        %v433 = vld [vmem:[%s412] sm:$0xff]
        %v434 = vld [vmem:[%s412 + $0x8] sm:$0xff]
        %v435 = vld [vmem:[%s412 + $0x10] sm:$0xff]
        %v436 = vld [vmem:[%s412 + $0x18] sm:$0xff]
        %438 = vset.pattern.permute.xlu0 0
        %439 = vperm.xlu0 %438, %v433
        %v440 = vpop.permute.xlu0 %439
        %443 = vset.pattern.permute.xlu0 0
        %444 = vperm.xlu0 %443, %v434
        %v445 = vpop.permute.xlu0 %444
        %448 = vset.pattern.permute.xlu0 0
        %449 = vperm.xlu0 %448, %v435
        %v450 = vpop.permute.xlu0 %449
        %453 = vset.pattern.permute.xlu0 0
        %454 = vperm.xlu0 %453, %v436
        %v455 = vpop.permute.xlu0 %454
        %v461 = vunpack.c.l.b16 %v421
        %v462 = vunpack.c.l.b16 %v422
        %v463 = vunpack.c.l.b16 %v423
        %v464 = vunpack.c.l.b16 %v424
        %v465 = vpack.c.b16 %v462, %v461
        %v466 = vpack.c.b16 %v464, %v463
        %v475 = vunpack.c.l.b16 %v425
        %v476 = vunpack.c.h.b16 %v425
        %v477 = vunpack.c.l.b16 %v426
        %v478 = vunpack.c.h.b16 %v426
        %v479 = vunpack.c.l.b16 %v427
        %v480 = vunpack.c.h.b16 %v427
        %v481 = vunpack.c.l.b16 %v428
        %v482 = vunpack.c.h.b16 %v428
        %v483 = vunpack.c.l.b16 %v429
        %v484 = vunpack.c.h.b16 %v429
        %v485 = vunpack.c.l.b16 %v430
        %v486 = vunpack.c.h.b16 %v430
        %v487 = vunpack.c.l.b16 %v431
        %v488 = vunpack.c.h.b16 %v431
        %v489 = vunpack.c.l.b16 %v432
        %v490 = vunpack.c.h.b16 %v432
        %v491 = vpack.c.b16 %v477, %v475
        %v492 = vpack.c.b16 %v478, %v476
        %v493 = vpack.c.b16 %v481, %v479
        %v494 = vpack.c.b16 %v482, %v480
        %v495 = vpack.c.b16 %v485, %v483
        %v496 = vpack.c.b16 %v486, %v484
        %v497 = vpack.c.b16 %v489, %v487
        %v498 = vpack.c.b16 %v490, %v488
        %vm507 = vcmask 523264
        %v509 = vsel %vm507, %v465, 0
        %v512 = vsel %vm507, %v466, 0
        %514 = vmatprep.subr.bf16.mxu0 0
        %515 = vmatpush1.bf16.msra.mxu0 0
        %516 = vmatprep.subr.bf16.mxu0 0
        %517 = vmatpush1.bf16.msra.mxu0 0
        %518 = vmatprep.subr.bf16.mxu0 0
        %519 = vmatpush1.bf16.msra.mxu0 0
        %520 = vmatprep.subr.bf16.mxu0 0
        %521 = vmatpush1.bf16.msra.mxu0 0
        %522 = vmatprep.subr.bf16.mxu0 %v498
        %523 = vmatpush1.bf16.msra.mxu0 %v497
        %524 = vmatprep.subr.bf16.mxu0 %v496
        %525 = vmatpush1.bf16.msra.mxu0 %v495
        %526 = vmatprep.subr.bf16.mxu0 %v494
        %527 = vmatpush1.bf16.msra.mxu0 %v493
        %528 = vmatprep.subr.bf16.mxu0 %v492
        %529 = vmatpush1.bf16.msra.mxu0 %v491
        %530 = vmatprep.subr.bf16.mxu0 0
        %531 = vmatpush2.bf16.msra.mxu0 0
        %532 = vmatprep.subr.bf16.mxu0 0
        %533 = vmatpush2.bf16.msra.mxu0 0
        %534 = vmatprep.subr.bf16.mxu0 0
        %535 = vmatpush2.bf16.msra.mxu0 0
        %536 = vmatprep.subr.bf16.mxu0 0
        %537 = vmatpush2.bf16.msra.mxu0 0
        %538 = vmatprep.subr.bf16.mxu0 0
        %539 = vmatpush2.bf16.msra.mxu0 0
        %540 = vmatprep.subr.bf16.mxu0 0
        %541 = vmatpush2.bf16.msra.mxu0 0
        %542 = vmatprep.subr.bf16.mxu0 0
        %543 = vmatpush2.bf16.msra.mxu0 0
        %544 = vmatprep.subr.bf16.mxu0 0
        %545 = vmatpush2.bf16.msra.mxu0 0
        %546 = vmatprep.mubr.bf16.mxu0 0
        %547 = vmatmul.mubr.bf16.gmra.mxu0 %v509
        %v548 = vpop.f32.mrf.mxu0
        %v549 = vadd.f32 %v440, %v548
        %v550 = vpop.f32.mrf.mxu0
        %v551 = vadd.f32 %v440, %v550
        %v552 = vpop.f32.mrf.mxu0
        %v553 = vadd.f32 %v445, %v552
        %v554 = vpop.f32.mrf.mxu0
        %v555 = vadd.f32 %v445, %v554
        %556 = vmatprep.mubr.bf16.mxu0 0
        %557 = vmatmul.mubr.bf16.gmra.mxu0 %v512
        %v558 = vpop.f32.mrf.mxu0
        %v559 = vadd.f32 %v450, %v558
        %v560 = vpop.f32.mrf.mxu0
        %v561 = vadd.f32 %v450, %v560
        %v562 = vpop.f32.mrf.mxu0
        %v563 = vadd.f32 %v455, %v562
        %v564 = vpop.f32.mrf.mxu0
        %v565 = vadd.f32 %v455, %v564
        %566 = vdwg.mxu0
        %v567 = vpack.c.bf16 %v553, %v549
        %v568 = vpack.c.bf16 %v555, %v551
        %v569 = vpack.c.bf16 %v563, %v559
        %v570 = vpack.c.bf16 %v565, %v561
        %v575 = vunpack.c.l.b16 %v567
        %v576 = vunpack.c.l.b16 %v568
        %v577 = vunpack.c.h.b16 %v567
        %v578 = vunpack.c.h.b16 %v568
        %v579 = vunpack.c.l.b16 %v569
        %v580 = vunpack.c.l.b16 %v570
        %v581 = vunpack.c.h.b16 %v569
        %v582 = vunpack.c.h.b16 %v570
        %v583 = vpack.c.b16 %v576, %v575
        %v584 = vpack.c.b16 %v578, %v577
        %v585 = vpack.c.b16 %v580, %v579
        %v586 = vpack.c.b16 %v582, %v581
        %591 = vst [vmem:[%s396] sm:$0xff] %v583
        %592 = vst [vmem:[%s396 + $0x8] sm:$0xff] %v584
        %593 = vst [vmem:[%s396 + $0x10] sm:$0xff] %v585
        %594 = vst [vmem:[%s396 + $0x18] sm:$0xff] %v586
        %v595 = vld [vmem:[%s417] sm:$0xff]
        %v596 = vld [vmem:[%s417 + $0x8] sm:$0xff]
        %v597 = vld [vmem:[%s417 + $0x10] sm:$0xff]
        %v598 = vld [vmem:[%s417 + $0x18] sm:$0xff]
        %v599 = vld [vmem:[%s330] sm:$0xff]
        %v600 = vld [vmem:[%s330 + $0x8] sm:$0xff]
        %v601 = vld [vmem:[%s330 + $0x10] sm:$0xff]
        %v602 = vld [vmem:[%s330 + $0x18] sm:$0xff]
        %v603 = vunpack.c.l.bf16 %v599
        %v604 = vunpack.c.h.bf16 %v599
        %v605 = vunpack.c.l.bf16 %v600
        %v606 = vunpack.c.h.bf16 %v600
        %v607 = vunpack.c.l.bf16 %v601
        %v608 = vunpack.c.h.bf16 %v601
        %v609 = vunpack.c.l.bf16 %v602
        %v610 = vunpack.c.h.bf16 %v602
        %612 = vset.pattern.permute.xlu0 0
        %613 = vperm.xlu0 %612, %v595
        %v614 = vpop.permute.xlu0 %613
        %617 = vset.pattern.permute.xlu0 0
        %618 = vperm.xlu0 %617, %v596
        %v619 = vpop.permute.xlu0 %618
        %622 = vset.pattern.permute.xlu0 0
        %623 = vperm.xlu0 %622, %v597
        %v624 = vpop.permute.xlu0 %623
        %627 = vset.pattern.permute.xlu0 0
        %628 = vperm.xlu0 %627, %v598
        %v629 = vpop.permute.xlu0 %628
        %v631 = vmul.f32 %v614, %v603
        %v632 = vmul.f32 %v614, %v604
        %v633 = vmul.f32 %v619, %v605
        %v634 = vmul.f32 %v619, %v606
        %v635 = vmul.f32 %v624, %v607
        %v636 = vmul.f32 %v624, %v608
        %v637 = vmul.f32 %v629, %v609
        %v638 = vmul.f32 %v629, %v610
        %v639 = vadd.f32 %v631, %v549
        %v640 = vadd.f32 %v632, %v551
        %v641 = vadd.f32 %v633, %v553
        %v642 = vadd.f32 %v634, %v555
        %v643 = vadd.f32 %v635, %v559
        %v644 = vadd.f32 %v636, %v561
        %v645 = vadd.f32 %v637, %v563
        %v646 = vadd.f32 %v638, %v565
        %v647 = vpack.c.bf16 %v641, %v639
        %v648 = vpack.c.bf16 %v642, %v640
        %v649 = vpack.c.bf16 %v645, %v643
        %v650 = vpack.c.bf16 %v646, %v644
        %v655 = vunpack.c.l.b16 %v647
        %v656 = vunpack.c.l.b16 %v648
        %v657 = vunpack.c.h.b16 %v647
        %v658 = vunpack.c.h.b16 %v648
        %v659 = vunpack.c.l.b16 %v649
        %v660 = vunpack.c.l.b16 %v650
        %v661 = vunpack.c.h.b16 %v649
        %v662 = vunpack.c.h.b16 %v650
        %v663 = vpack.c.b16 %v656, %v655
        %v664 = vpack.c.b16 %v658, %v657
        %v665 = vpack.c.b16 %v660, %v659
        %v666 = vpack.c.b16 %v662, %v661
        %671 = vst [vmem:[%s389] sm:$0xff] %v663
        %672 = vst [vmem:[%s389 + $0x8] sm:$0xff] %v664
        %673 = vst [vmem:[%s389 + $0x10] sm:$0xff] %v665
        %674 = vst [vmem:[%s389 + $0x18] sm:$0xff] %v666
        %s675 = sand.u32 %s186, 1
        %s676 = scalar_lea.sflag [#allocation4], %s675
        %s677 = sand.u32 %s186, 1
        %s678 = smul.addr %s677, 32
        %s679 = scalar_lea.vmem [#allocation7], %s678
        %s680 = sand.u32 %s214, 1
        %s681 = scalar_lea.sflag [#allocation9], %s680
        %s682 = sand.u32 %s214, 1
        %s683 = smul.addr %s682, 32
        %s684 = scalar_lea.vmem [#allocation8], %s683
        // Predicated region
        $region49: #{tpu_custom_call.1} parent=39 // pred_check
          %p685 = pneg %p196
        $region50: #{tpu_custom_call.1} parent=39 // pred_check_branch
          %687 = sbr.rel (%p685) target = $region52
        $region51: #{tpu_custom_call.1} parent=39 // pred_region
          %s688 = smul.u32 2, %s35
          %s690 = ssub.s32 512, 512
          %691 = vsyncadd %s676, %s690
          %s692 = smul.addr %s34, 8
          %s693 = sadd.s32 %s688, %s692
          %s694 = smul.addr %s693, 64
          %s695 = scalar_lea.hbm %s5, %s694
          %s696 = sshll.u32 %s679, 4
          %s697 = int_to_ptr.vmem [resolvable:$true] %s696
          %702 = dma.vmem_to_hbm [thread:$0]  %s697, 512, %s695, %s676, 128, 128, 8
        $region52: #{tpu_custom_call.1} parent=39 // pred_fallthru
          _
        // Predicated region
        $region53: #{tpu_custom_call.1} parent=39 // pred_check
          %p703 = pneg %p224
        $region54: #{tpu_custom_call.1} parent=39 // pred_check_branch
          %705 = sbr.rel (%p703) target = $region56
        $region55: #{tpu_custom_call.1} parent=39 // pred_region
          %s706 = smul.u32 2, %s35
          %s708 = ssub.s32 512, 512
          %709 = vsyncadd %s681, %s708
          %s710 = smul.addr %s34, 8
          %s711 = sadd.s32 %s706, %s710
          %s712 = smul.addr %s711, 64
          %s713 = scalar_lea.hbm %s6, %s712
          %s714 = sshll.u32 %s684, 4
          %s715 = int_to_ptr.vmem [resolvable:$true] %s714
          %720 = dma.vmem_to_hbm [thread:$0]  %s715, 512, %s713, %s681, 128, 128, 8
        $region56: #{tpu_custom_call.1} parent=39 // pred_fallthru
          _
      $region40: #{tpu_custom_call.1} parent=5 // pred_fallthru
        _
      %p721 = scmp.le.s32.totalorder 2, %s25
      // Predicated region
      $region57: #{tpu_custom_call.1} parent=5 // pred_check
        %p722 = pneg %p721
      $region58: #{tpu_custom_call.1} parent=5 // pred_check_branch
        %724 = sbr.rel (%p722) target = $region60
      $region59: #{tpu_custom_call.1} parent=5 // pred_region
        %s725 = ssub.s32 %s25, 2
        // Predicated region
        $region61: #{tpu_custom_call.1} parent=59 // pred_check
          %p726 = pneg %p202
        $region62: #{tpu_custom_call.1} parent=59 // pred_check_branch
          %728 = sbr.rel (%p726) target = $region64
        $region63: #{tpu_custom_call.1} parent=59 // pred_region
          %s729 = sand.u32 %s187, 1
          %s730 = scalar_lea.sflag [#allocation4], %s729
          %s731 = sand.u32 %s187, 1
          %s732 = smul.addr %s731, 32
          %s733 = scalar_lea.vmem [#allocation7], %s732
          %734 = dma.done %s730, 512
        $region64: #{tpu_custom_call.1} parent=59 // pred_fallthru
          _
        // Predicated region
        $region65: #{tpu_custom_call.1} parent=59 // pred_check
          %p735 = pneg %p230
        $region66: #{tpu_custom_call.1} parent=59 // pred_check_branch
          %737 = sbr.rel (%p735) target = $region68
        $region67: #{tpu_custom_call.1} parent=59 // pred_region
          %s738 = sand.u32 %s215, 1
          %s739 = scalar_lea.sflag [#allocation9], %s738
          %s740 = sand.u32 %s215, 1
          %s741 = smul.addr %s740, 32
          %s742 = scalar_lea.vmem [#allocation8], %s741
          %743 = dma.done %s739, 512
        $region68: #{tpu_custom_call.1} parent=59 // pred_fallthru
          _
      $region60: #{tpu_custom_call.1} parent=5 // pred_fallthru
        _
    $region6: #{tpu_custom_call.1} parent=1 // loop_footer
      %s29 = sadd.s32 1, %s25
    $region7: #{tpu_custom_call.1} parent=1 // loop_footer_branch
      %24 = sbr.rel target = $region3
    $region8: #{tpu_custom_call.1} parent=1 // loop_exit
      _
    %744 = vsyncpa [#allocation3], 1
    %s745 = scalar_lea.sflag [#allocation3], 1
    %746 = vsyncpa %s745, 1
    %747 = vsyncpa [#allocation6], 1
    %s748 = scalar_lea.sflag [#allocation6], 1
    %749 = vsyncpa %s748, 1
    %750 = vsyncpa [#allocation4], 1
    %s751 = scalar_lea.sflag [#allocation4], 1
    %752 = vsyncpa %s751, 1
    %753 = vsyncpa [#allocation9], 1
    %s754 = scalar_lea.sflag [#allocation9], 1
    %755 = vsyncpa %s754, 1

</llo_original>
